<compile_context>
chip_gen: v6e
topology: v6e:2x2x1
jax: 0.10.0
libtpu: 0.0.40
codegen_flags: <defaults>
</compile_context>

<pallas_src>
import jax
import jax.numpy as jnp
from jax.experimental import pallas as pl
from jax.experimental.pallas import tpu as pltpu

MARGIN = 0.1


def _vmem_budget():
    """Returns (vmem_limit_bytes, input double-buffer budget) per TPU generation."""
    default_cap = 64 * 1024 * 1024
    try:
        cap = getattr(pltpu.get_tpu_info(), "vmem_capacity_bytes", default_cap)
    except Exception:
        cap = default_cap
    if cap >= 128 * 1024 * 1024:
        # v5e / v6e: 128 MiB physical VMEM -> large steps amortize ~0.35us/step.
        return 80 * 1024 * 1024, 64 * 1024 * 1024
    # v7x: only 64 MiB physical VMEM -> keep well clear of it.
    return 48 * 1024 * 1024, 40 * 1024 * 1024


def _select_tiles(B, D, itemsize, budget):
    """Pick (batch_tile, d_tile): 3 inputs x 2 pipeline buffers must fit budget."""
    rows_full_d = budget // (6 * D * itemsize)
    if rows_full_d >= min(B, 128):
        # Feature dim fits in one block -> tile the batch only.
        td = D
        tb = B if rows_full_d >= B else (rows_full_d // 128) * 128
        # v7x megacore: guarantee >= 2 "parallel" batch steps for larger B so both
        # TensorCores stream from HBM.  At worst neutral on 1-TC chips (v5e/v6e).
        if B >= 256:
            half = max(128, (((B + 1) // 2) // 128) * 128)
            tb = min(tb, half)
        return tb, td
    # Feature dim too large even for a 128-row block: tile D as well and
    # accumulate per-row squared sums in the revisited output blocks.
    tb = min(B, 128)
    cols = budget // (6 * tb * itemsize)
    td = max(128, (cols // 128) * 128)
    return tb, min(td, D)


def triplet_loss(anchor, positive, negative, *, block_b=None, block_d=None):
    B, D = anchor.shape
    assert positive.shape == (B, D) and negative.shape == (B, D)
    if positive.dtype != anchor.dtype:
        positive = positive.astype(anchor.dtype)
    if negative.dtype != anchor.dtype:
        negative = negative.astype(anchor.dtype)
    itemsize = anchor.dtype.itemsize

    vmem_limit, budget = _vmem_budget()
    tb, td = _select_tiles(B, D, itemsize, budget)
    if block_b is not None:  # test override
        assert block_b == B or (block_b < B and block_b % 128 == 0)
        tb = block_b
    if block_d is not None:  # test override
        assert block_d == D or (block_d < D and block_d % 128 == 0)
        td = block_d

    gb = pl.cdiv(B, tb)
    gd = pl.cdiv(D, td)
    d_ragged = (D % td) != 0

    def kernel(a_ref, p_ref, n_ref, pos_ref, neg_ref):
        # Native-width loads, upcast on-chip (f32 arithmetic on all generations).
        a = a_ref[...].astype(jnp.float32)
        dp = a - p_ref[...].astype(jnp.float32)
        dn = a - n_ref[...].astype(jnp.float32)
        if d_ragged:
            # Zero OOB columns of the ragged last D tile before squaring; OOB
            # rows of a ragged batch tile need no mask (their per-row sums only
            # land in the masked-off part of the (1, tb) output block).
            kd = pl.program_id(1)
            col = jax.lax.broadcasted_iota(jnp.int32, dp.shape, 1) + kd * td
            valid = col < D
            dp = jnp.where(valid, dp, 0.0)
            dn = jnp.where(valid, dn, 0.0)
        pos_part = jnp.sum(dp * dp, axis=1).reshape(pos_ref.shape)  # (1, tb)
        neg_part = jnp.sum(dn * dn, axis=1).reshape(neg_ref.shape)  # (1, tb)
        if gd == 1:
            pos_ref[...] = pos_part
            neg_ref[...] = neg_part
        else:
            kd = pl.program_id(1)

            @pl.when(kd == 0)
            def _():
                pos_ref[...] = pos_part
                neg_ref[...] = neg_part

            @pl.when(kd != 0)
            def _():
                pos_ref[...] = pos_ref[...] + pos_part
                neg_ref[...] = neg_ref[...] + neg_part

    in_spec = pl.BlockSpec((tb, td), lambda i, k: (i, k))
    out_spec = pl.BlockSpec((1, tb), lambda i, k: (0, i))  # lane-dense outputs

    cost = pl.CostEstimate(
        flops=6 * B * D,
        transcendentals=0,
        bytes_accessed=3 * B * D * itemsize + 2 * B * 4,
    )

    pos_sq, neg_sq = pl.pallas_call(
        kernel,
        out_shape=(jax.ShapeDtypeStruct((1, B), jnp.float32),
                   jax.ShapeDtypeStruct((1, B), jnp.float32)),
        grid=(gb, gd),
        in_specs=[in_spec, in_spec, in_spec],
        out_specs=(out_spec, out_spec),
        compiler_params=pltpu.CompilerParams(
            dimension_semantics=("parallel", "arbitrary"),
            vmem_limit_bytes=vmem_limit,
        ),
        cost_estimate=cost,
    )(anchor, positive, negative)

    # Tiny O(B) epilogue in the wrapper: global pos reduction + sqrt + relu.
    pos_dist = jnp.sqrt(jnp.sum(pos_sq[0]))       # scalar Frobenius norm
    neg_dist = jnp.sqrt(neg_sq[0])                # (B,) per-row distance
    return jnp.maximum(pos_dist - neg_dist + MARGIN, 0.0)


def triplet_loss_ref(anchor, positive, negative):
    pos_dist = jnp.sqrt(jnp.sum((anchor - positive) ** 2))
    neg_dist = jnp.sqrt(jnp.sum((anchor - negative) ** 2, axis=1))
    return jnp.maximum(pos_dist - neg_dist + MARGIN, 0.0)


if __name__ == "__main__":
    key = jax.random.PRNGKey(0)
    k1, k2, k3, k4 = jax.random.split(key, 4)

    # 1) Small single-block path (whole batch + feature dim in one tile).
    B, D = 8, 128
    a = jax.random.normal(k1, (B, D), dtype=jnp.float32)
    p = jax.random.normal(k2, (B, D), dtype=jnp.float32)
    n = jax.random.normal(k3, (B, D), dtype=jnp.float32)
    out = triplet_loss(a, p, n)
    jax.block_until_ready(out)
    ref = triplet_loss_ref(a, p, n)
    assert out.shape == (B,)
    assert jnp.allclose(out, ref, rtol=1e-5, atol=1e-5), (out, ref)

    # 2) Ragged multi-tile batch path (no padding pass), forced tb=128.
    B2, D2 = 200, 128
    ka, kb, kc = jax.random.split(k4, 3)
    a2 = jax.random.normal(ka, (B2, D2), dtype=jnp.float32)
    p2 = jax.random.normal(kb, (B2, D2), dtype=jnp.float32)
    n2 = jax.random.normal(kc, (B2, D2), dtype=jnp.float32)
    out2 = triplet_loss(a2, p2, n2, block_b=128)
    jax.block_until_ready(out2)
    ref2 = triplet_loss_ref(a2, p2, n2)
    assert out2.shape == (B2,)
    assert jnp.allclose(out2, ref2, rtol=1e-4, atol=1e-4), (out2, ref2)

    # 3) bf16 inputs streamed natively and upcast in-kernel.
    a3, p3, n3 = (x.astype(jnp.bfloat16) for x in (a2, p2, n2))
    out3 = triplet_loss(a3, p3, n3, block_b=128)
    jax.block_until_ready(out3)
    ref3 = triplet_loss_ref(a3.astype(jnp.float32), p3.astype(jnp.float32),
                            n3.astype(jnp.float32))
    assert jnp.allclose(out3, ref3, rtol=1e-3, atol=1e-3), (out3, ref3)

    # 4) Ragged D-tiling path (column mask + output-block accumulation).
    B4, D4 = 64, 200
    kx, ky, kz = jax.random.split(kc, 3)
    a4 = jax.random.normal(kx, (B4, D4), dtype=jnp.float32)
    p4 = jax.random.normal(ky, (B4, D4), dtype=jnp.float32)
    n4 = jax.random.normal(kz, (B4, D4), dtype=jnp.float32)
    out4 = triplet_loss(a4, p4, n4, block_d=128)
    jax.block_until_ready(out4)
    ref4 = triplet_loss_ref(a4, p4, n4)
    assert jnp.allclose(out4, ref4, rtol=1e-4, atol=1e-4), (out4, ref4)

    print("KERNEL_OK")
</pallas_src>

<mosaic_0001>
module attributes {stable_mosaic.version = 11 : i64} {
  func.func @kernel(%arg0: i32, %arg1: i32, %arg2: memref<8x128xf32, #tpu.memory_space<vmem>>, %arg3: memref<8x128xf32, #tpu.memory_space<vmem>>, %arg4: memref<8x128xf32, #tpu.memory_space<vmem>>, %arg5: memref<1x8xf32, #tpu.memory_space<vmem>>, %arg6: memref<1x8xf32, #tpu.memory_space<vmem>>) attributes {dimension_semantics = [#tpu.dimension_semantics<parallel>, #tpu.dimension_semantics<arbitrary>], iteration_bounds = array<i64: 1, 1>, scalar_prefetch = 0 : i64, scratch_operands = 0 : i64, tpu.core_type = #tpu.core_type<tc>, window_params = [{transform_indices = @transform_0, window_bounds = array<i64: 8, 128>}, {transform_indices = @transform_1, window_bounds = array<i64: 8, 128>}, {transform_indices = @transform_2, window_bounds = array<i64: 8, 128>}, {transform_indices = @transform_3, window_bounds = array<i64: 1, 8>}, {transform_indices = @transform_4, window_bounds = array<i64: 1, 8>}]} {
    %c0 = arith.constant 0 : index
    %c0_0 = arith.constant 0 : index
    %0 = vector.load %arg2[%c0, %c0_0] : memref<8x128xf32, #tpu.memory_space<vmem>>, vector<8x128xf32>
    %c0_1 = arith.constant 0 : index
    %c0_2 = arith.constant 0 : index
    %1 = vector.load %arg3[%c0_1, %c0_2] : memref<8x128xf32, #tpu.memory_space<vmem>>, vector<8x128xf32>
    %2 = arith.subf %0, %1 : vector<8x128xf32>
    %c0_3 = arith.constant 0 : index
    %c0_4 = arith.constant 0 : index
    %3 = vector.load %arg4[%c0_3, %c0_4] : memref<8x128xf32, #tpu.memory_space<vmem>>, vector<8x128xf32>
    %4 = arith.subf %0, %3 : vector<8x128xf32>
    %5 = arith.mulf %2, %2 : vector<8x128xf32>
    %cst = arith.constant dense<0.000000e+00> : vector<8xf32>
    %6 = vector.multi_reduction <add>, %5, %cst [1] : vector<8x128xf32> to vector<8xf32>
    %7 = vector.shape_cast %6 : vector<8xf32> to vector<1x8xf32>
    %8 = arith.mulf %4, %4 : vector<8x128xf32>
    %cst_5 = arith.constant dense<0.000000e+00> : vector<8xf32>
    %9 = vector.multi_reduction <add>, %8, %cst_5 [1] : vector<8x128xf32> to vector<8xf32>
    %10 = vector.shape_cast %9 : vector<8xf32> to vector<1x8xf32>
    %c0_6 = arith.constant 0 : index
    %c0_7 = arith.constant 0 : index
    %11 = vector.load %arg5[%c0_6, %c0_7] : memref<1x8xf32, #tpu.memory_space<vmem>>, vector<1x8xf32>
    tpu.vector_store %arg5[%c0_6, %c0_7], %7 {strides = array<i32>} : memref<1x8xf32, #tpu.memory_space<vmem>>, vector<1x8xf32>,
    %c0_8 = arith.constant 0 : index
    %c0_9 = arith.constant 0 : index
    %12 = vector.load %arg6[%c0_8, %c0_9] : memref<1x8xf32, #tpu.memory_space<vmem>>, vector<1x8xf32>
    tpu.vector_store %arg6[%c0_8, %c0_9], %10 {strides = array<i32>} : memref<1x8xf32, #tpu.memory_space<vmem>>, vector<1x8xf32>,
    return
  }
  func.func @transform_0(%arg0: i32, %arg1: i32) -> (i32, i32) {
    %c0_i32 = arith.constant 0 : i32
    return %arg0, %arg1 : i32, i32
  }
  func.func @transform_1(%arg0: i32, %arg1: i32) -> (i32, i32) {
    %c0_i32 = arith.constant 0 : i32
    return %arg0, %arg1 : i32, i32
  }
  func.func @transform_2(%arg0: i32, %arg1: i32) -> (i32, i32) {
    %c0_i32 = arith.constant 0 : i32
    return %arg0, %arg1 : i32, i32
  }
  func.func @transform_3(%arg0: i32, %arg1: i32) -> (i32, i32) {
    %c0_i32 = arith.constant 0 : i32
    %c0_i32_0 = arith.constant 0 : i32
    return %c0_i32, %arg0 : i32, i32
  }
  func.func @transform_4(%arg0: i32, %arg1: i32) -> (i32, i32) {
    %c0_i32 = arith.constant 0 : i32
    %c0_i32_0 = arith.constant 0 : i32
    return %c0_i32, %arg0 : i32, i32
  }
}

</mosaic_0001>

<llo_original>
// kernel: tpu_custom_call.1
$region0: #{tpu_custom_call.1}
  #allocation0 [shape = 'u32[]', space=smem, size = 0x4, offset = 0x4, fixed_abs, tag = 'smem constant byte address 0x4 - core index']
  #allocation1 [shape = 'u32[144,128]{1,0:T(1,128)}', space=vmem, size = 0x12000, scoped, tag = 'internal scratch']
  %s0 = inlined_call_operand.hbm [shape: f32[8,128], index: 0, kind: input, shape index: {}]
  %s1 = inlined_call_operand.hbm [shape: f32[8,128], index: 1, kind: input, shape index: {}]
  %s2 = inlined_call_operand.hbm [shape: f32[8,128], index: 2, kind: input, shape index: {}]
  %s3 = inlined_call_operand.hbm [shape: f32[1,8], index: 3, kind: output, shape index: {0}]
  %s4 = inlined_call_operand.hbm [shape: f32[1,8], index: 4, kind: output, shape index: {1}]
  %5 = xla_tuple %s3, %s4
  %s6 = sld [smem:[#allocation0]]
  $region42: #{tpu_custom_call.1} parent=0
    _
  %s8 = ssub.s32 1, %s6
  %s9 = scalar_select 0, %s8, %s6
  $region1: #{tpu_custom_call.1} parent=0
    #allocation2 [shape = 'u8[4096]{0}', space=vmem, size = 0x1000, scoped, tag = 'input window, operand 0, single buffered']
    #allocation3 [shape = 's32[1]{0}', space=sflag, size = 0x4, scoped, tag = 'scoped memory for tpu_custom_call.1']
    #allocation4 [shape = 's32[1]{0}', space=sflag, size = 0x4, scoped, tag = 'scoped memory for tpu_custom_call.1']
    #allocation5 [shape = 'u8[4096]{0}', space=vmem, size = 0x1000, scoped, tag = 'input window, operand 1, single buffered']
    #allocation6 [shape = 's32[1]{0}', space=sflag, size = 0x4, scoped, tag = 'scoped memory for tpu_custom_call.1']
    #allocation7 [shape = 'u8[4096]{0}', space=vmem, size = 0x1000, scoped, tag = 'input window, operand 2, single buffered']
    #allocation8 [shape = 'u8[512]{0}', space=vmem, size = 0x400, scoped, tag = 'output window, operand 0, single buffered']
    #allocation9 [shape = 'u8[512]{0}', space=vmem, size = 0x400, scoped, tag = 'output window, operand 1, single buffered']
    #allocation10 [shape = 's32[1]{0}', space=sflag, size = 0x4, scoped, tag = 'scoped memory for tpu_custom_call.1']
    %10 = vsyncpa [#allocation3], 0
    %11 = vsyncpa [#allocation6], 0
    %12 = vsyncpa [#allocation4], 0
    %13 = vsyncpa [#allocation10], 0
    // Predicated region
    $region2: #{tpu_custom_call.1} parent=1 // pred_check
      _
    $region3: #{tpu_custom_call.1} parent=1 // pred_check_branch
      %15 = sbr.rel (0) target = $region5
    $region4: #{tpu_custom_call.1} parent=1 // pred_region
      %s17 = ssub.s32 128, 128
      %18 = vsyncadd [#allocation3], %s17
      %s20 = sshll.u32 [#allocation2], 4
      %s21 = int_to_ptr.vmem [resolvable:$true] %s20
      %23 = dma.hbm_to_vmem [thread:$0]  %s0, 128, %s21, [#allocation3]
    $region5: #{tpu_custom_call.1} parent=1 // pred_fallthru
      _
    // Predicated region
    $region6: #{tpu_custom_call.1} parent=1 // pred_check
      _
    $region7: #{tpu_custom_call.1} parent=1 // pred_check_branch
      %25 = sbr.rel (0) target = $region9
    $region8: #{tpu_custom_call.1} parent=1 // pred_region
      %s27 = ssub.s32 128, 128
      %28 = vsyncadd [#allocation6], %s27
      %s30 = sshll.u32 [#allocation5], 4
      %s31 = int_to_ptr.vmem [resolvable:$true] %s30
      %33 = dma.hbm_to_vmem [thread:$0]  %s1, 128, %s31, [#allocation6]
    $region9: #{tpu_custom_call.1} parent=1 // pred_fallthru
      _
    // Predicated region
    $region10: #{tpu_custom_call.1} parent=1 // pred_check
      _
    $region11: #{tpu_custom_call.1} parent=1 // pred_check_branch
      %35 = sbr.rel (0) target = $region13
    $region12: #{tpu_custom_call.1} parent=1 // pred_region
      %s37 = ssub.s32 128, 128
      %38 = vsyncadd [#allocation6], %s37
      %s40 = sshll.u32 [#allocation7], 4
      %s41 = int_to_ptr.vmem [resolvable:$true] %s40
      %43 = dma.hbm_to_vmem [thread:$0]  %s2, 128, %s41, [#allocation6]
    $region13: #{tpu_custom_call.1} parent=1 // pred_fallthru
      _
    // Predicated region
    $region14: #{tpu_custom_call.1} parent=1 // pred_check
      _
    $region15: #{tpu_custom_call.1} parent=1 // pred_check_branch
      %45 = sbr.rel (0) target = $region17
    $region16: #{tpu_custom_call.1} parent=1 // pred_region
      %46 = dma.done [#allocation3], 128
    $region17: #{tpu_custom_call.1} parent=1 // pred_fallthru
      _
    // Predicated region
    $region18: #{tpu_custom_call.1} parent=1 // pred_check
      _
    $region19: #{tpu_custom_call.1} parent=1 // pred_check_branch
      %48 = sbr.rel (0) target = $region21
    $region20: #{tpu_custom_call.1} parent=1 // pred_region
      %49 = dma.done [#allocation6], 128
    $region21: #{tpu_custom_call.1} parent=1 // pred_fallthru
      _
    // Predicated region
    $region22: #{tpu_custom_call.1} parent=1 // pred_check
      _
    $region23: #{tpu_custom_call.1} parent=1 // pred_check_branch
      %51 = sbr.rel (0) target = $region25
    $region24: #{tpu_custom_call.1} parent=1 // pred_region
      %52 = dma.done [#allocation6], 128
    $region25: #{tpu_custom_call.1} parent=1 // pred_fallthru
      _
    %v53 = vld [vmem:[#allocation2] sm:$0xff]
    %v54 = vld [vmem:[#allocation5] sm:$0xff]
    %v55 = vsub.f32 %v53, %v54
    %v56 = vld [vmem:[#allocation7] sm:$0xff]
    %v57 = vsub.f32 %v53, %v56
    %v58 = vmul.f32 %v55, %v55
    %59 = vadd.xlane.f32.xlu0 %v58
    %v60 = vpop.xlane.xlu0 %59
    %v61 = vmul.f32 %v57, %v57
    %62 = vadd.xlane.f32.xlu0 %v61
    %v63 = vpop.xlane.xlu0 %62
    %v65 = vlaneseq
    %v66 = vand.u32 %v65, 127
    %v67 = vlaneseq
    %v68 = vshrl.u32 %v67, 7
    %v69 = vsub.s32 %v66, %v68
    %v70 = vrot.slane %v60, %v69
    %vm72 = vcmask 57344
    %73 = vst.msk [vmem:[#allocation8] sm:$0x1] %vm72, %v70
    %v75 = vlaneseq
    %v76 = vshrl.u32 %v75, 7
    %v77 = vsub.s32 %v66, %v76
    %v78 = vrot.slane %v63, %v77
    %80 = vst.msk [vmem:[#allocation9] sm:$0x1] %vm72, %v78
    // Predicated region
    $region26: #{tpu_custom_call.1} parent=1 // pred_check
      _
    $region27: #{tpu_custom_call.1} parent=1 // pred_check_branch
      %82 = sbr.rel (0) target = $region29
    $region28: #{tpu_custom_call.1} parent=1 // pred_region
      %s84 = ssub.s32 16, 16
      %85 = vsyncadd [#allocation4], %s84
      %s87 = sshll.u32 [#allocation8], 4
      %s88 = int_to_ptr.vmem [resolvable:$true] %s87
      %90 = dma.vmem_to_hbm [thread:$0]  %s88, 16, %s3, [#allocation4]
    $region29: #{tpu_custom_call.1} parent=1 // pred_fallthru
      _
    // Predicated region
    $region30: #{tpu_custom_call.1} parent=1 // pred_check
      _
    $region31: #{tpu_custom_call.1} parent=1 // pred_check_branch
      %92 = sbr.rel (0) target = $region33
    $region32: #{tpu_custom_call.1} parent=1 // pred_region
      %s94 = ssub.s32 16, 16
      %95 = vsyncadd [#allocation10], %s94
      %s97 = sshll.u32 [#allocation9], 4
      %s98 = int_to_ptr.vmem [resolvable:$true] %s97
      %100 = dma.vmem_to_hbm [thread:$0]  %s98, 16, %s4, [#allocation10]
    $region33: #{tpu_custom_call.1} parent=1 // pred_fallthru
      _
    // Predicated region
    $region34: #{tpu_custom_call.1} parent=1 // pred_check
      _
    $region35: #{tpu_custom_call.1} parent=1 // pred_check_branch
      %102 = sbr.rel (0) target = $region37
    $region36: #{tpu_custom_call.1} parent=1 // pred_region
      %103 = dma.done [#allocation4], 16
    $region37: #{tpu_custom_call.1} parent=1 // pred_fallthru
      _
    // Predicated region
    $region38: #{tpu_custom_call.1} parent=1 // pred_check
      _
    $region39: #{tpu_custom_call.1} parent=1 // pred_check_branch
      %105 = sbr.rel (0) target = $region41
    $region40: #{tpu_custom_call.1} parent=1 // pred_region
      %106 = dma.done [#allocation10], 16
    $region41: #{tpu_custom_call.1} parent=1 // pred_fallthru
      _
    %107 = vsyncpa [#allocation3], 1
    %108 = vsyncpa [#allocation6], 1
    %109 = vsyncpa [#allocation4], 1
    %110 = vsyncpa [#allocation10], 1

</llo_original>
